<compile_context>
chip_gen: v7x
topology: tpu7x:2x2x1
jax: 0.10.0
libtpu: 0.0.40
codegen_flags: <defaults>
</compile_context>

<pallas_src>
import functools

import jax
import jax.numpy as jnp
from jax.experimental import pallas as pl
from jax.experimental.pallas import tpu as pltpu

_LANE = 128
_SUB = 8
_MAX_TILE_ROWS = 4096      # 4096*128*4B = 2 MiB per f32 input per buffer
_MIN_TILE_ROWS = 256       # divisor-search floor (128 KiB f32 blocks)
_VMEM_LIMIT = 32 * 1024 * 1024


def _cdiv(a, b):
    return -(-a // b)


def _round_up(a, b):
    return ((a + b - 1) // b) * b


def _sublane_align(min_itemsize):
    # Second-minor block dim must be a multiple of 8 (4B dtypes), 16 (2B),
    # 32 (1B) unless the block spans the full array dim.
    return 8 * (4 // max(1, min(4, int(min_itemsize))))


def _choose_tiling(rows, align):
    """Return (tile_rows, rows_padded) with rows_padded % tile_rows == 0.

    Prefers a zero-copy layout: a single full-extent block (rows <= max) or a
    tile that exactly divides `rows`.  Falls back to row padding only when no
    suitable divisor exists.
    """
    if rows <= _MAX_TILE_ROWS:
        return rows, rows                       # single full-extent block
    hi = (_MAX_TILE_ROWS // align) * align
    for t in range(hi, _MIN_TILE_ROWS - 1, -align):
        if rows % t == 0:
            return t, rows                      # zero-copy multi-block
    return hi, _round_up(rows, hi)              # padded fallback (rare)


def _focal_elem(x, t, alpha, gamma, assume_binary_targets):
    """Elementwise alpha * (1 - pt)**gamma * BCE_with_logits(x, t) in f32."""
    z = jnp.exp(-jnp.abs(x))                    # exp(-|x|)
    bce = jnp.maximum(x, 0.0) - x * t + jnp.log1p(z)

    if assume_binary_targets:
        # pt = exp(-bce); for t in {0,1} the numerator is 1 when
        # t == (x >= 0), else exp(-|x|) = z.  approx reciprocal -> EUP slot.
        num = jnp.where(t == (x >= 0.0).astype(jnp.float32), 1.0, z)
        pt = num * pl.reciprocal(1.0 + z, approx=True)
    else:
        pt = jnp.exp(-bce)                      # always-correct path

    one_m_pt = 1.0 - pt
    g = float(gamma)
    if g == 2.0:
        w = one_m_pt * one_m_pt                 # avoid pow -> exp+log on EUP
    elif g == 1.0:
        w = one_m_pt
    elif g == 0.0:
        w = jnp.ones_like(one_m_pt)
    else:
        w = jnp.power(one_m_pt, g)
    return alpha * w * bce


def _focal_sum_kernel(x_ref, t_ref, o_ref, acc_ref, *, alpha, gamma, n_valid,
                      tile_rows, steps, n_blocks, grid_blocks,
                      assume_binary_targets):
    c = pl.program_id(0)          # "parallel" (per-core) axis
    j = pl.program_id(1)          # "arbitrary" (reduction) axis
    blk = c * steps + j
    tile_elems = tile_rows * _LANE

    @pl.when(j == 0)
    def _():
        acc_ref[...] = jnp.zeros_like(acc_ref)

    x = x_ref[...].astype(jnp.float32)
    t = t_ref[...].astype(jnp.float32)
    fl = _focal_elem(x, t, alpha, gamma, assume_binary_targets)

    def _tile_sum(v):
        # Vreg-shaped (8,128) accumulator when the tile allows it so the
        # per-step work stays on the VPU; else a single sublane reduce.
        if acc_ref.shape[0] == _SUB:
            return jnp.sum(v.reshape(-1, _SUB, _LANE), axis=0)
        return jnp.sum(v, axis=0, keepdims=True)

    has_tail = n_valid < n_blocks * tile_elems          # static
    has_phantom = grid_blocks > n_blocks                # static

    if not has_tail and not has_phantom:
        acc_ref[...] += _tile_sum(fl)                   # fast unmasked path
    else:
        thresh = n_blocks - 1 if has_tail else n_blocks

        @pl.when(blk < thresh)
        def _():
            acc_ref[...] += _tile_sum(fl)

        @pl.when(blk >= thresh)
        def _():
            # Block-relative mask: covers the ragged tail of the last real
            # block and zeroes phantom blocks from the core round-up.
            row = jax.lax.broadcasted_iota(jnp.int32, fl.shape, 0)
            lane = jax.lax.broadcasted_iota(jnp.int32, fl.shape, 1)
            lidx = row * _LANE + lane
            rem = n_valid - blk * tile_elems            # <= 0 for phantoms
            acc_ref[...] += _tile_sum(jnp.where(lidx < rem, fl, 0.0))

    @pl.when(j == steps - 1)
    def _():
        o_ref[...] = jnp.sum(acc_ref[...], keepdims=True)


def _focal_none_kernel(x_ref, t_ref, o_ref, *, alpha, gamma,
                       assume_binary_targets):
    x = x_ref[...].astype(jnp.float32)
    t = t_ref[...].astype(jnp.float32)
    fl = _focal_elem(x, t, alpha, gamma, assume_binary_targets)
    o_ref[...] = fl.astype(o_ref.dtype)


def binary_focal_loss(inputs, targets, alpha=0.25, gamma=2.0, reduction="mean",
                      assume_binary_targets=False):
    """Pallas implementation of BinaryFocalLoss.forward.

    inputs, targets: (N, 1, H, W) arrays (logits / targets in [0, 1]).
    Set assume_binary_targets=True only if targets are exactly in {0, 1}
    (enables an EUP-lean fast path).
    """
    x = inputs
    t = targets
    # Mirror torch's .squeeze(1): only squeeze when that dim has size 1.
    if x.ndim >= 2 and x.shape[1] == 1:
        x = jnp.squeeze(x, axis=1)
    if t.ndim >= 2 and t.shape[1] == 1:
        t = jnp.squeeze(t, axis=1)

    # Dtype normalization.  Narrow integer / bool targets are NOT upcast to
    # f32 here; they travel at native width and are cast in-kernel.
    if not jnp.issubdtype(x.dtype, jnp.floating) or x.dtype.itemsize > 4:
        x = x.astype(jnp.float32)
    if t.dtype == jnp.bool_:
        t = t.astype(jnp.int8)
    elif jnp.issubdtype(t.dtype, jnp.floating) and t.dtype.itemsize > 4:
        t = t.astype(jnp.float32)
    elif jnp.issubdtype(t.dtype, jnp.integer) and t.dtype.itemsize > 4:
        t = t.astype(jnp.int32)

    orig_shape = x.shape
    out_dtype = x.dtype
    n = int(x.size)

    if n == 0:
        if reduction == "mean":
            return jnp.float32(jnp.nan)
        if reduction == "sum":
            return jnp.float32(0.0)
        return jnp.zeros(orig_shape, out_dtype)

    rows = _cdiv(n, _LANE)
    align = _sublane_align(min(x.dtype.itemsize, t.dtype.itemsize))
    tile_rows, rows_padded = _choose_tiling(rows, align)
    n_blocks = rows_padded // tile_rows
    pad_elems = rows_padded * _LANE - n

    if pad_elems:
        # Rare fallback / ragged-lane tail: one padding copy.
        x2 = jnp.pad(x.reshape(-1), (0, pad_elems)).reshape(rows_padded, _LANE)
        t2 = jnp.pad(t.reshape(-1), (0, pad_elems)).reshape(rows_padded, _LANE)
    else:
        # Free, metadata-only reshape to a lane-dense (rows, 128) layout.
        x2 = x.reshape(rows_padded, _LANE)
        t2 = t.reshape(rows_padded, _LANE)

    do_reduce = reduction in ("mean", "sum")
    n_elems = rows_padded * _LANE
    in_bytes = x2.size * x2.dtype.itemsize + t2.size * t2.dtype.itemsize
    out_bytes = 8 if do_reduce else n_elems * jnp.dtype(out_dtype).itemsize
    cost = pl.CostEstimate(flops=int(14 * n_elems),
                           transcendentals=int(3 * n_elems),
                           bytes_accessed=int(in_bytes + out_bytes))

    if do_reduce:
        n_cores = 2 if n_blocks >= 8 else 1
        steps = _cdiv(n_blocks, n_cores)
        grid_blocks = n_cores * steps
        acc_rows = _SUB if tile_rows % _SUB == 0 else 1

        if grid_blocks > n_blocks:
            # Clamp phantom block indices (from the 2-core round-up) onto the
            # last valid block; their contribution is zeroed in-kernel.
            def in_idx(ci, ji):
                return (jnp.minimum(ci * steps + ji, n_blocks - 1), 0)
        else:
            def in_idx(ci, ji):
                return (ci * steps + ji, 0)

        in_spec = pl.BlockSpec((tile_rows, _LANE), in_idx)
        kernel = functools.partial(
            _focal_sum_kernel, alpha=float(alpha), gamma=float(gamma),
            n_valid=n, tile_rows=tile_rows, steps=steps, n_blocks=n_blocks,
            grid_blocks=grid_blocks,
            assume_binary_targets=assume_binary_targets)
        partials = pl.pallas_call(
            kernel,
            out_shape=jax.ShapeDtypeStruct((n_cores, 1), jnp.float32),
            grid_spec=pltpu.PrefetchScalarGridSpec(
                num_scalar_prefetch=0,
                grid=(n_cores, steps),
                in_specs=[in_spec, in_spec],
                out_specs=pl.BlockSpec((1, 1), lambda ci, ji: (ci, 0)),
                scratch_shapes=[pltpu.VMEM((acc_rows, _LANE), jnp.float32)],
            ),
            compiler_params=pltpu.CompilerParams(
                # TODO(synk): switch the leading axis to pltpu.CORE_PARALLEL
                # (gated on chip generation) for a guaranteed dual-TC split
                # on v7x-class parts; "parallel" is the portable choice here.
                dimension_semantics=("parallel", "arbitrary"),
                vmem_limit_bytes=_VMEM_LIMIT),
            cost_estimate=cost,
        )(x2, t2)
        total = jnp.sum(partials)
        if reduction == "mean":
            return total / jnp.float32(n)
        return total

    # 'none' path.
    kernel = functools.partial(
        _focal_none_kernel, alpha=float(alpha), gamma=float(gamma),
        assume_binary_targets=assume_binary_targets)
    tile_spec = pl.BlockSpec((tile_rows, _LANE), lambda i: (i, 0))
    out = pl.pallas_call(
        kernel,
        out_shape=jax.ShapeDtypeStruct((rows_padded, _LANE), out_dtype),
        grid_spec=pltpu.PrefetchScalarGridSpec(
            num_scalar_prefetch=0,
            grid=(n_blocks,),
            in_specs=[tile_spec, tile_spec],
            out_specs=tile_spec,
        ),
        compiler_params=pltpu.CompilerParams(
            dimension_semantics=("parallel",),
            vmem_limit_bytes=_VMEM_LIMIT),
        cost_estimate=cost,
    )(x2, t2)
    if pad_elems:
        out = out.reshape(-1)[:n]               # drop padded tail (rare path)
    return out.reshape(orig_shape)


def _reference(inputs, targets, alpha=0.25, gamma=2.0, reduction="mean"):
    x = jnp.squeeze(inputs, 1).astype(jnp.float32)
    t = jnp.squeeze(targets, 1).astype(jnp.float32)
    bce = jnp.maximum(x, 0.0) - x * t + jnp.log1p(jnp.exp(-jnp.abs(x)))
    pt = jnp.exp(-bce)
    fl = alpha * (1.0 - pt) ** gamma * bce
    if reduction == "mean":
        return jnp.mean(fl)
    if reduction == "sum":
        return jnp.sum(fl)
    return fl


if __name__ == "__main__":
    key = jax.random.PRNGKey(0)
    k1, k2, k3, k4, k5, k6 = jax.random.split(key, 6)

    # Small NCHW (C == 1) case implied by the module's forward.
    logits = jax.random.normal(k1, (2, 1, 16, 16), dtype=jnp.float32) * 2.0
    targets = (jax.random.uniform(k2, (2, 1, 16, 16)) > 0.5).astype(jnp.float32)

    loss = jax.block_until_ready(
        binary_focal_loss(logits, targets, alpha=0.25, gamma=2.0,
                          reduction="mean"))
    ref = _reference(logits, targets)
    assert jnp.allclose(loss, ref, rtol=2e-5, atol=1e-6), (loss, ref)

    # 'none' path: zero-copy in and out (n is a multiple of 128).
    fl = jax.block_until_ready(
        binary_focal_loss(logits, targets, reduction="none"))
    assert fl.shape == (2, 16, 16)
    assert jnp.allclose(fl, _reference(logits, targets, reduction="none"),
                        rtol=2e-5, atol=1e-6)

    # Odd size: exercises the lane-pad corner case and the in-kernel tail mask.
    logits2 = jax.random.normal(k3, (1, 1, 641, 480), dtype=jnp.float32) * 3.0
    targets2 = (jax.random.uniform(k4, (1, 1, 641, 480)) > 0.5).astype(
        jnp.float32)
    loss2 = jax.block_until_ready(
        binary_focal_loss(logits2, targets2, reduction="sum"))
    ref2 = _reference(logits2, targets2, reduction="sum")
    assert jnp.allclose(loss2, ref2, rtol=1e-4, atol=1e-2), (loss2, ref2)

    # Large, 128-aligned: zero-copy reshape, multi-block grid, 2-way core
    # split with one clamped phantom block (9 blocks on a (2, 5) grid).
    logits3 = jax.random.normal(k5, (2, 1, 1536, 1536), dtype=jnp.float32) * 2.0
    targets3 = (jax.random.uniform(k6, (2, 1, 1536, 1536)) > 0.5).astype(
        jnp.float32)
    loss3 = jax.block_until_ready(
        binary_focal_loss(logits3, targets3, reduction="sum"))
    ref3 = _reference(logits3, targets3, reduction="sum")
    assert jnp.allclose(loss3, ref3, rtol=2e-4, atol=1.0), (loss3, ref3)

    # Narrow integer targets stay int8 through the DMA (no f32 upcast copy).
    log_i8 = jax.random.normal(k1, (1, 1, 32, 128), dtype=jnp.float32)
    tgt_i8 = (jax.random.uniform(k2, (1, 1, 32, 128)) > 0.5).astype(jnp.int8)
    loss_i8 = jax.block_until_ready(
        binary_focal_loss(log_i8, tgt_i8, reduction="mean"))
    ref_i8 = _reference(log_i8, tgt_i8.astype(jnp.float32))
    assert jnp.allclose(loss_i8, ref_i8, rtol=2e-5, atol=1e-6), (loss_i8, ref_i8)

    # Opt-in binary fast path (algebraic pt + EUP approx reciprocal): looser
    # tolerance since vrcp is an approximation.
    loss_b = jax.block_until_ready(
        binary_focal_loss(logits, targets, reduction="mean",
                          assume_binary_targets=True))
    assert jnp.allclose(loss_b, ref, rtol=1e-2, atol=1e-4), (loss_b, ref)

    print("KERNEL_OK")
</pallas_src>

<mosaic_0001>
module attributes {stable_mosaic.version = 11 : i64} {
  func.func @_focal_sum_kernel(%arg0: i32, %arg1: i32, %arg2: memref<4x128xf32, #tpu.memory_space<vmem>>, %arg3: memref<4x128xf32, #tpu.memory_space<vmem>>, %arg4: memref<1x1xf32, #tpu.memory_space<vmem>>, %arg5: memref<1x128xf32, #tpu.memory_space<vmem>>) attributes {dimension_semantics = [#tpu.dimension_semantics<parallel>, #tpu.dimension_semantics<arbitrary>], iteration_bounds = array<i64: 1, 1>, scalar_prefetch = 0 : i64, scratch_operands = 1 : i64, tpu.core_type = #tpu.core_type<tc>, window_params = [{transform_indices = @transform_0, window_bounds = array<i64: 4, 128>}, {transform_indices = @transform_1, window_bounds = array<i64: 4, 128>}, {transform_indices = @transform_2, window_bounds = array<i64: 1, 1>}]} {
    %c0_i32 = arith.constant 0 : i32
    %0 = arith.cmpi eq, %arg1, %c0_i32 : i32
    %1 = arith.extui %0 : i1 to i32
    %c0_i32_0 = arith.constant 0 : i32
    %2 = arith.cmpi ne, %1, %c0_i32_0 : i32
    scf.if %2 {
      %cst_15 = arith.constant 0.000000e+00 : f32
      %32 = vector.broadcast %cst_15 : f32 to vector<1x128xf32>
      %c0_16 = arith.constant 0 : index
      %c0_17 = arith.constant 0 : index
      %33 = vector.load %arg5[%c0_16, %c0_17] : memref<1x128xf32, #tpu.memory_space<vmem>>, vector<1x128xf32>
      tpu.vector_store %arg5[%c0_16, %c0_17], %32 {strides = array<i32>} : memref<1x128xf32, #tpu.memory_space<vmem>>, vector<1x128xf32>,
    } else {
    }
    %c0 = arith.constant 0 : index
    %c0_1 = arith.constant 0 : index
    %3 = vector.load %arg2[%c0, %c0_1] : memref<4x128xf32, #tpu.memory_space<vmem>>, vector<4x128xf32>
    %c0_2 = arith.constant 0 : index
    %c0_3 = arith.constant 0 : index
    %4 = vector.load %arg3[%c0_2, %c0_3] : memref<4x128xf32, #tpu.memory_space<vmem>>, vector<4x128xf32>
    %5 = math.absf %3 : vector<4x128xf32>
    %cst = arith.constant 0.000000e+00 : f32
    %6 = vector.broadcast %cst : f32 to vector<4x128xf32>
    %7 = arith.subf %6, %5 : vector<4x128xf32>
    %8 = math.exp %7 : vector<4x128xf32>
    %cst_4 = arith.constant 0.000000e+00 : f32
    %9 = vector.broadcast %cst_4 : f32 to vector<4x128xf32>
    %10 = arith.maximumf %3, %9 : vector<4x128xf32>
    %11 = arith.mulf %3, %4 : vector<4x128xf32>
    %12 = arith.subf %10, %11 : vector<4x128xf32>
    %13 = math.log1p %8 : vector<4x128xf32>
    %14 = arith.addf %12, %13 : vector<4x128xf32>
    %cst_5 = arith.constant 0.000000e+00 : f32
    %15 = vector.broadcast %cst_5 : f32 to vector<4x128xf32>
    %16 = arith.subf %15, %14 : vector<4x128xf32>
    %17 = math.exp %16 : vector<4x128xf32>
    %cst_6 = arith.constant 1.000000e+00 : f32
    %18 = vector.broadcast %cst_6 : f32 to vector<4x128xf32>
    %19 = arith.subf %18, %17 : vector<4x128xf32>
    %20 = arith.mulf %19, %19 : vector<4x128xf32>
    %cst_7 = arith.constant 2.500000e-01 : f32
    %21 = vector.broadcast %cst_7 : f32 to vector<4x128xf32>
    %22 = arith.mulf %21, %20 : vector<4x128xf32>
    %23 = arith.mulf %22, %14 : vector<4x128xf32>
    %c0_8 = arith.constant 0 : index
    %c0_9 = arith.constant 0 : index
    %24 = vector.load %arg5[%c0_8, %c0_9] : memref<1x128xf32, #tpu.memory_space<vmem>>, vector<1x128xf32>
    %cst_10 = arith.constant dense<0.000000e+00> : vector<128xf32>
    %25 = vector.multi_reduction <add>, %23, %cst_10 [0] : vector<4x128xf32> to vector<128xf32>
    %26 = vector.shape_cast %25 : vector<128xf32> to vector<1x128xf32>
    %27 = arith.addf %24, %26 : vector<1x128xf32>
    %c0_11 = arith.constant 0 : index
    %c0_12 = arith.constant 0 : index
    %28 = vector.load %arg5[%c0_11, %c0_12] : memref<1x128xf32, #tpu.memory_space<vmem>>, vector<1x128xf32>
    tpu.vector_store %arg5[%c0_11, %c0_12], %27 {strides = array<i32>} : memref<1x128xf32, #tpu.memory_space<vmem>>, vector<1x128xf32>,
    %c0_i32_13 = arith.constant 0 : i32
    %29 = arith.cmpi eq, %arg1, %c0_i32_13 : i32
    %30 = arith.extui %29 : i1 to i32
    %c0_i32_14 = arith.constant 0 : i32
    %31 = arith.cmpi ne, %30, %c0_i32_14 : i32
    scf.if %31 {
      %c0_15 = arith.constant 0 : index
      %c0_16 = arith.constant 0 : index
      %32 = vector.load %arg5[%c0_15, %c0_16] : memref<1x128xf32, #tpu.memory_space<vmem>>, vector<1x128xf32>
      %33 = vector.shape_cast %32 : vector<1x128xf32> to vector<1x1x128xf32>
      %cst_17 = arith.constant dense<0.000000e+00> : vector<1xf32>
      %34 = vector.multi_reduction <add>, %33, %cst_17 [1, 2] : vector<1x1x128xf32> to vector<1xf32>
      %35 = vector.shape_cast %34 : vector<1xf32> to vector<1x1x1xf32>
      %36 = vector.extract %35[0, 0, 0] : f32 from vector<1x1x1xf32>
      %37 = vector.broadcast %36 : f32 to vector<1x1xf32>
      %c0_18 = arith.constant 0 : index
      %c0_19 = arith.constant 0 : index
      %38 = vector.load %arg4[%c0_18, %c0_19] : memref<1x1xf32, #tpu.memory_space<vmem>>, vector<1x1xf32>
      tpu.vector_store %arg4[%c0_18, %c0_19], %37 {strides = array<i32>} : memref<1x1xf32, #tpu.memory_space<vmem>>, vector<1x1xf32>,
    } else {
    }
    return
  }
  func.func @transform_0(%arg0: i32, %arg1: i32) -> (i32, i32) {
    %c1_i32 = arith.constant 1 : i32
    %0 = arith.muli %arg0, %c1_i32 : i32
    %1 = arith.addi %0, %arg1 : i32
    %c0_i32 = arith.constant 0 : i32
    %c0_i32_0 = arith.constant 0 : i32
    return %1, %c0_i32 : i32, i32
  }
  func.func @transform_1(%arg0: i32, %arg1: i32) -> (i32, i32) {
    %c1_i32 = arith.constant 1 : i32
    %0 = arith.muli %arg0, %c1_i32 : i32
    %1 = arith.addi %0, %arg1 : i32
    %c0_i32 = arith.constant 0 : i32
    %c0_i32_0 = arith.constant 0 : i32
    return %1, %c0_i32 : i32, i32
  }
  func.func @transform_2(%arg0: i32, %arg1: i32) -> (i32, i32) {
    %c0_i32 = arith.constant 0 : i32
    %c0_i32_0 = arith.constant 0 : i32
    return %arg0, %c0_i32 : i32, i32
  }
}

</mosaic_0001>

<llo_original>
// kernel: tpu_custom_call.1
$region0: #{tpu_custom_call.1}
  #allocation0 [shape = 'u32[]', space=smem, size = 0x4, offset = 0x4, fixed_abs, tag = 'smem constant byte address 0x4 - core index']
  #allocation1 [shape = 'u32[144,128]{1,0:T(1,128)}', space=vmem, size = 0x12000, scoped, tag = 'internal scratch']
  #allocation2 [shape = 'f32[1,128]{1,0:T(1,128)}', space=vmem, size = 0x200, scoped, tag = 'scratch operand']
  %s0 = inlined_call_operand.hbm [shape: f32[4,128], index: 0, kind: input, shape index: {}]
  %s1 = inlined_call_operand.hbm [shape: f32[4,128], index: 1, kind: input, shape index: {}]
  %s2 = inlined_call_operand.hbm [shape: f32[1,1], index: 2, kind: output, shape index: {}]
  %s3 = sld [smem:[#allocation0]]
  $region34: #{tpu_custom_call.1} parent=0
    _
  %s5 = ssub.s32 1, %s3
  %s6 = scalar_select 0, %s5, %s3
  $region1: #{tpu_custom_call.1} parent=0
    #allocation3 [shape = 'u8[2048]{0}', space=vmem, size = 0x800, scoped, tag = 'input window, operand 0, single buffered']
    #allocation4 [shape = 's32[1]{0}', space=sflag, size = 0x4, scoped, tag = 'scoped memory for tpu_custom_call.1']
    #allocation5 [shape = 's32[1]{0}', space=sflag, size = 0x4, scoped, tag = 'scoped memory for tpu_custom_call.1']
    #allocation6 [shape = 'u8[2048]{0}', space=vmem, size = 0x800, scoped, tag = 'input window, operand 1, single buffered']
    #allocation7 [shape = 's32[1]{0}', space=sflag, size = 0x4, scoped, tag = 'scoped memory for tpu_custom_call.1']
    #allocation8 [shape = 'u8[512]{0}', space=vmem, size = 0x400, scoped, tag = 'output window, operand 0, single buffered']
    %7 = vsyncpa [#allocation4], 0
    %8 = vsyncpa [#allocation7], 0
    %9 = vsyncpa [#allocation5], 0
    // Predicated region
    $region2: #{tpu_custom_call.1} parent=1 // pred_check
      _
    $region3: #{tpu_custom_call.1} parent=1 // pred_check_branch
      %11 = sbr.rel (0) target = $region5
    $region4: #{tpu_custom_call.1} parent=1 // pred_region
      %s12 = sadd.s32 0, 0
      %s14 = ssub.s32 64, 64
      %15 = vsyncadd [#allocation4], %s14
      %s16 = smul.addr %s12, 64
      %s17 = scalar_lea.hbm %s0, %s16
      %s19 = sshll.u32 [#allocation3], 4
      %s20 = int_to_ptr.vmem [resolvable:$true] %s19
      %22 = dma.hbm_to_vmem [thread:$0]  %s17, 64, %s20, [#allocation4]
    $region5: #{tpu_custom_call.1} parent=1 // pred_fallthru
      _
    // Predicated region
    $region6: #{tpu_custom_call.1} parent=1 // pred_check
      _
    $region7: #{tpu_custom_call.1} parent=1 // pred_check_branch
      %24 = sbr.rel (0) target = $region9
    $region8: #{tpu_custom_call.1} parent=1 // pred_region
      %s25 = sadd.s32 0, 0
      %s27 = ssub.s32 64, 64
      %28 = vsyncadd [#allocation7], %s27
      %s29 = smul.addr %s25, 64
      %s30 = scalar_lea.hbm %s1, %s29
      %s32 = sshll.u32 [#allocation6], 4
      %s33 = int_to_ptr.vmem [resolvable:$true] %s32
      %35 = dma.hbm_to_vmem [thread:$0]  %s30, 64, %s33, [#allocation7]
    $region9: #{tpu_custom_call.1} parent=1 // pred_fallthru
      _
    // Predicated region
    $region10: #{tpu_custom_call.1} parent=1 // pred_check
      _
    $region11: #{tpu_custom_call.1} parent=1 // pred_check_branch
      %37 = sbr.rel (0) target = $region13
    $region12: #{tpu_custom_call.1} parent=1 // pred_region
      %38 = dma.done [#allocation4], 64
    $region13: #{tpu_custom_call.1} parent=1 // pred_fallthru
      _
    // Predicated region
    $region14: #{tpu_custom_call.1} parent=1 // pred_check
      _
    $region15: #{tpu_custom_call.1} parent=1 // pred_check_branch
      %40 = sbr.rel (0) target = $region17
    $region16: #{tpu_custom_call.1} parent=1 // pred_region
      %41 = dma.done [#allocation7], 64
    $region17: #{tpu_custom_call.1} parent=1 // pred_fallthru
      _
    %s42 = sadd.s32 0, 0
    %s43 = sadd.s32 0, 0
    %p44 = scmp.eq.s32.totalorder 0, 0
    // Predicated region
    $region18: #{tpu_custom_call.1} parent=1 // pred_check
      %p45 = pneg %p44
    $region19: #{tpu_custom_call.1} parent=1 // pred_check_branch
      %47 = sbr.rel (%p45) target = $region21
    $region20: #{tpu_custom_call.1} parent=1 // pred_region
      %48 = vst [vmem:[#allocation2] sm:$0x1] 0.0
    $region21: #{tpu_custom_call.1} parent=1 // pred_fallthru
      _
    %v49 = vld [vmem:[#allocation3] sm:$0xf]
    %v50 = vld [vmem:[#allocation6] sm:$0xf]
    %v51 = vand.u32 2147483647, %v49
    %v52 = vsub.f32 0.0, %v51
    %v53 = vmul.f32 %v52, 1.442695
    %v54 = vpow.pop %v53
    %v55 = vmax.f32 %v49, 0.0
    %v56 = vmul.f32 %v49, %v50
    %v57 = vsub.f32 %v55, %v56
    %v58 = vadd.f32 %v54, 1.0
    %v59 = vlog2.pop %v58
    %v60 = vmul.f32 %v59, 0.6931472
    %v61 = vmul.f32 -0.5, %v54
    %v62 = vadd.f32 %v61, 1.0
    %v63 = vmul.f32 %v62, %v54
    %v64 = vand.u32 2147483647, %v54
    %vm65 = vcmp.lt.f32.partialorder %v64, 0.0004427343
    %v66 = vsel %vm65, %v63, %v60
    %v67 = vadd.f32 %v57, %v66
    %v68 = vsub.f32 0.0, %v67
    %v69 = vmul.f32 %v68, 1.442695
    %v70 = vpow.pop %v69
    %v71 = vsub.f32 1.0, %v70
    %v72 = vmul.f32 %v71, %v71
    %v73 = vmul.f32 %v72, 0.25
    %v74 = vmul.f32 %v73, %v67
    %v75 = vld [vmem:[#allocation2] sm:$0x1]
    %vm76 = vcmask 1043456
    %v77 = vsel %vm76, %v74, 0.0
    %v78 = vrot.slane %v77, 4
    %v79 = vadd.f32 %v77, %v78
    %v80 = vrot.slane %v79, 2
    %v81 = vadd.f32 %v79, %v80
    %v82 = vrot.slane %v81, 1
    %v83 = vadd.f32 %v81, %v82
    %v84 = vadd.f32 %v75, %v83
    %85 = vst [vmem:[#allocation2] sm:$0x1] %v84
    // Predicated region
    $region22: #{tpu_custom_call.1} parent=1 // pred_check
      %p86 = pneg %p44
    $region23: #{tpu_custom_call.1} parent=1 // pred_check_branch
      %88 = sbr.rel (%p86) target = $region25
    $region24: #{tpu_custom_call.1} parent=1 // pred_region
      %v89 = vld [vmem:[#allocation2] sm:$0x1]
      %vm90 = vcmask 1040384
      %v91 = vsel %vm90, %v89, 0.0
      %92 = vadd.xlane.f32.xlu0 %v91
      %v93 = vpop.xlane.xlu0 %92
      %v94 = vrot.slane %v93, 4
      %v95 = vadd.f32 %v93, %v94
      %v96 = vrot.slane %v95, 2
      %v97 = vadd.f32 %v95, %v96
      %v98 = vrot.slane %v97, 1
      %v99 = vadd.f32 %v97, %v98
      %s100 = vtos %v99
      %v101 = vstv %s100
      %vm102 = vcmask 0
      %103 = vst.msk [vmem:[#allocation8] sm:$0x1] %vm102, %v101
    $region25: #{tpu_custom_call.1} parent=1 // pred_fallthru
      _
    // Predicated region
    $region26: #{tpu_custom_call.1} parent=1 // pred_check
      _
    $region27: #{tpu_custom_call.1} parent=1 // pred_check_branch
      %105 = sbr.rel (0) target = $region29
    $region28: #{tpu_custom_call.1} parent=1 // pred_region
      %s107 = ssub.s32 16, 16
      %108 = vsyncadd [#allocation5], %s107
      %s110 = sshll.u32 [#allocation8], 4
      %s111 = int_to_ptr.vmem [resolvable:$true] %s110
      %113 = dma.vmem_to_hbm [thread:$0]  %s111, 16, %s2, [#allocation5]
    $region29: #{tpu_custom_call.1} parent=1 // pred_fallthru
      _
    // Predicated region
    $region30: #{tpu_custom_call.1} parent=1 // pred_check
      _
    $region31: #{tpu_custom_call.1} parent=1 // pred_check_branch
      %115 = sbr.rel (0) target = $region33
    $region32: #{tpu_custom_call.1} parent=1 // pred_region
      %116 = dma.done [#allocation5], 16
    $region33: #{tpu_custom_call.1} parent=1 // pred_fallthru
      _
    %117 = vsyncpa [#allocation4], 1
    %118 = vsyncpa [#allocation7], 1
    %119 = vsyncpa [#allocation5], 1

</llo_original>
